<compile_context>
chip_gen: v5e
topology: v5e:2x2
jax: 0.10.0
libtpu: 0.0.40
codegen_flags: <defaults>
</compile_context>

<pallas_src>
import functools

import jax
import jax.numpy as jnp
from jax.experimental import pallas as pl
from jax.experimental.pallas import tpu as pltpu


def _vfl_kernel(*refs, alpha, gamma, tw_mode, out_mode, n_rows, tile_n):
    """One batch tile of VariFocal loss.

    refs layout (depends on specialization):
      output_ref (TILE_N, K), target_ref (TILE_N, K),
      [tw_ref (TILE_N, 1) or (TILE_N, K)],
      result_ref: (TILE_N, K) loss map      if out_mode == 'map'
                  (1, 8, 128) partial sum   if out_mode == 'sum'
    """
    idx = 0
    out_ref = refs[idx]; idx += 1
    tgt_ref = refs[idx]; idx += 1
    tw_ref = None
    if tw_mode != 'none':
        tw_ref = refs[idx]; idx += 1
    res_ref = refs[idx]

    x = out_ref[...].astype(jnp.float32)
    t = tgt_ref[...].astype(jnp.float32)

    # label = (target > 0.0001).to(target)
    label = (t > 0.0001).astype(jnp.float32)

    # weight = alpha * sigmoid(output)**gamma * (1 - label) + target
    sig = jax.nn.sigmoid(x)
    if float(gamma) == 2.0:
        sig_pow = sig * sig
    else:
        sig_pow = jnp.power(sig, jnp.float32(gamma))
    weight = jnp.float32(alpha) * sig_pow * (1.0 - label) + t

    # output = output.clip(-10, 10)
    xc = jnp.clip(x, -10.0, 10.0)

    # F.binary_cross_entropy_with_logits(x, t, reduction='none')
    #   = max(x, 0) - x*t + log(1 + exp(-|x|))
    bce = jnp.maximum(xc, 0.0) - xc * t + jnp.log1p(jnp.exp(-jnp.abs(xc)))
    vfl = bce * weight

    if tw_mode != 'none':
        # (TILE_N, 1) broadcasts across lanes; (TILE_N, K) multiplies directly.
        vfl = vfl * tw_ref[...].astype(jnp.float32)

    # loss[isinf] = 0 ; loss[isnan] = 0
    vfl = jnp.where(jnp.isfinite(vfl), vfl, 0.0)

    if out_mode == 'map':
        res_ref[...] = vfl.astype(res_ref.dtype)
    else:
        # Zero out padded rows of a partial last tile before reducing.
        if n_rows % tile_n:
            rows = jax.lax.broadcasted_iota(jnp.int32, vfl.shape, 0)
            rows = rows + pl.program_id(0) * tile_n
            vfl = jnp.where(rows < n_rows, vfl, 0.0)
        s = jnp.sum(vfl)
        res_ref[...] = jnp.broadcast_to(s, res_ref.shape)


def varifocal_loss(output, target, target_weight=None, *,
                   use_target_weight=False, loss_weight=1.0,
                   reduction='mean', alpha=0.75, gamma=2.0,
                   tile_n=None):
    assert reduction in ('mean', 'sum', 'none')
    N, K = output.shape

    # ---- choose batch tile (multiple of 8, VMEM-safe on v7x) ----
    if tile_n is None:
        tile_n = max(8, ((512 * 128) // max(K, 1)) // 8 * 8)
        tile_n = min(tile_n, 1024)
    if N <= tile_n:
        tile_n = N                          # single tile: block == full dim
    else:
        tile_n = max(8, (tile_n // 8) * 8)  # sublane-aligned tile
    num_tiles = pl.cdiv(N, tile_n)

    # ---- inputs ----
    args = [output, target]
    in_specs = [pl.BlockSpec((tile_n, K), lambda i: (i, 0)),
                pl.BlockSpec((tile_n, K), lambda i: (i, 0))]
    tw_mode = 'none'
    if use_target_weight:
        assert target_weight is not None
        tw = jnp.asarray(target_weight)
        if tw.ndim == 1:
            tw = tw[:, None]                # unsqueeze(1)
        if tw.shape == (N, 1):
            tw_mode = 'col'                 # stream N*4 B, broadcast in-kernel
            in_specs.append(pl.BlockSpec((tile_n, 1), lambda i: (i, 0)))
        else:
            assert tw.shape == (N, K)
            tw_mode = 'full'
            in_specs.append(pl.BlockSpec((tile_n, K), lambda i: (i, 0)))
        args.append(tw)

    # ---- outputs ----
    if reduction == 'none':
        out_mode = 'map'
        out_shape = jax.ShapeDtypeStruct((N, K), output.dtype)
        out_specs = pl.BlockSpec((tile_n, K), lambda i: (i, 0))
        out_bytes = N * K * jnp.dtype(output.dtype).itemsize
    else:
        out_mode = 'sum'                    # per-tile partial sums only
        out_shape = jax.ShapeDtypeStruct((num_tiles, 8, 128), jnp.float32)
        out_specs = pl.BlockSpec((1, 8, 128), lambda i: (i, 0, 0))
        out_bytes = num_tiles * 8 * 128 * 4

    kernel = functools.partial(
        _vfl_kernel, alpha=float(alpha), gamma=float(gamma),
        tw_mode=tw_mode, out_mode=out_mode, n_rows=N, tile_n=tile_n)

    elems = N * K
    in_bytes = sum(int(a.size) * int(a.dtype.itemsize) for a in args)
    cost = pl.CostEstimate(flops=12 * elems,
                           transcendentals=3 * elems,
                           bytes_accessed=in_bytes + out_bytes)

    result = pl.pallas_call(
        kernel,
        out_shape=out_shape,
        grid_spec=pl.GridSpec(
            grid=(num_tiles,),
            in_specs=in_specs,
            out_specs=out_specs),
        compiler_params=pltpu.CompilerParams(
            dimension_semantics=("parallel",)),
        cost_estimate=cost,
    )(*args)

    if reduction == 'none':
        return result * jnp.asarray(loss_weight, result.dtype)
    total = jnp.sum(result[:, 0, 0])
    if reduction == 'mean':
        total = total / jnp.float32(N * K)
    return total * jnp.float32(loss_weight)


def _varifocal_loss_ref(output, target, target_weight=None, *,
                        use_target_weight=False, loss_weight=1.0,
                        reduction='mean', alpha=0.75, gamma=2.0):
    """Pure-JAX reference mirroring the PyTorch module exactly."""
    label = (target > 0.0001).astype(target.dtype)
    sig = jax.nn.sigmoid(output)
    weight = alpha * sig ** gamma * (1.0 - label) + target
    xc = jnp.clip(output, -10.0, 10.0)
    bce = jnp.maximum(xc, 0.0) - xc * target + jnp.log1p(jnp.exp(-jnp.abs(xc)))
    loss = bce * weight
    if use_target_weight:
        tw = target_weight
        if tw.ndim == 1:
            tw = tw[:, None]
        loss = loss * tw
    loss = jnp.where(jnp.isfinite(loss), loss, 0.0)
    if reduction == 'sum':
        loss = loss.sum()
    elif reduction == 'mean':
        loss = loss.mean()
    return loss * loss_weight


if __name__ == "__main__":
    key = jax.random.PRNGKey(0)
    k1, k2, k3 = jax.random.split(key, 3)

    N, K = 16, 128  # [batch, num_labels]
    output = jax.random.normal(k1, (N, K), dtype=jnp.float32) * 3.0
    # sparse soft targets: mostly zero, a few positive scores in (0, 1]
    raw = jax.random.uniform(k2, (N, K), dtype=jnp.float32)
    target = jnp.where(raw > 0.9, raw, 0.0)
    target_weight = jax.random.uniform(k3, (N,), dtype=jnp.float32)

    # 1) default config (mean, no target weight): multi-tile grid + default tile
    ref_mean = _varifocal_loss_ref(output, target)
    loss_mean = jax.block_until_ready(varifocal_loss(output, target, tile_n=8))
    assert jnp.allclose(loss_mean, ref_mean, rtol=1e-5, atol=1e-6), (loss_mean, ref_mean)
    loss_mean_d = jax.block_until_ready(varifocal_loss(output, target))
    assert jnp.allclose(loss_mean_d, ref_mean, rtol=1e-5, atol=1e-6)

    # 2) per-row target weight [N] + 'none' reduction + loss_weight
    loss_none = jax.block_until_ready(
        varifocal_loss(output, target, target_weight,
                       use_target_weight=True, reduction='none',
                       loss_weight=2.0, tile_n=8))
    ref_none = _varifocal_loss_ref(output, target, target_weight,
                                   use_target_weight=True, reduction='none',
                                   loss_weight=2.0)
    assert loss_none.shape == (N, K)
    assert jnp.allclose(loss_none, ref_none, rtol=1e-5, atol=1e-6)

    # 3) full [N, K] target weight + 'sum' reduction
    tw_full = jax.random.uniform(jax.random.PRNGKey(7), (N, K), dtype=jnp.float32)
    loss_sum = jax.block_until_ready(
        varifocal_loss(output, target, tw_full,
                       use_target_weight=True, reduction='sum', tile_n=8))
    ref_sum = _varifocal_loss_ref(output, target, tw_full,
                                  use_target_weight=True, reduction='sum')
    assert jnp.allclose(loss_sum, ref_sum, rtol=1e-5, atol=1e-4)

    # 4) ragged batch (N not a multiple of tile_n) exercises the row mask
    N2 = 13
    out2 = jax.random.normal(jax.random.PRNGKey(11), (N2, K), jnp.float32) * 3.0
    raw2 = jax.random.uniform(jax.random.PRNGKey(12), (N2, K), jnp.float32)
    tgt2 = jnp.where(raw2 > 0.9, raw2, 0.0)
    loss_m2 = jax.block_until_ready(
        varifocal_loss(out2, tgt2, reduction='mean', tile_n=8))
    ref_m2 = _varifocal_loss_ref(out2, tgt2, reduction='mean')
    assert jnp.allclose(loss_m2, ref_m2, rtol=1e-5, atol=1e-6), (loss_m2, ref_m2)

    print("KERNEL_OK")
</pallas_src>

<mosaic_0001>
module attributes {stable_mosaic.version = 11 : i64} {
  func.func @_vfl_kernel(%arg0: i32, %arg1: memref<8x128xf32, #tpu.memory_space<vmem>>, %arg2: memref<8x128xf32, #tpu.memory_space<vmem>>, %arg3: memref<1x8x128xf32, #tpu.memory_space<vmem>>) attributes {dimension_semantics = [#tpu.dimension_semantics<parallel>], iteration_bounds = array<i64: 2>, scalar_prefetch = 0 : i64, scratch_operands = 0 : i64, tpu.core_type = #tpu.core_type<tc>, window_params = [{transform_indices = @transform_0, window_bounds = array<i64: 8, 128>}, {transform_indices = @transform_1, window_bounds = array<i64: 8, 128>}, {transform_indices = @transform_2, window_bounds = array<i64: 1, 8, 128>}]} {
    %c0 = arith.constant 0 : index
    %c0_0 = arith.constant 0 : index
    %0 = vector.load %arg1[%c0, %c0_0] : memref<8x128xf32, #tpu.memory_space<vmem>>, vector<8x128xf32>
    %c0_1 = arith.constant 0 : index
    %c0_2 = arith.constant 0 : index
    %1 = vector.load %arg2[%c0_1, %c0_2] : memref<8x128xf32, #tpu.memory_space<vmem>>, vector<8x128xf32>
    %cst = arith.constant 9.99999974E-5 : f32
    %2 = vector.broadcast %cst : f32 to vector<8x128xf32>
    %3 = arith.cmpf ogt, %1, %2 : vector<8x128xf32>
    %4 = arith.extui %3 : vector<8x128xi1> to vector<8x128xi32>
    %5 = arith.sitofp %4 : vector<8x128xi32> to vector<8x128xf32>
    %6 = arith.negf %0 : vector<8x128xf32>
    %7 = math.exp %6 : vector<8x128xf32>
    %cst_3 = arith.constant 1.000000e+00 : f32
    %8 = vector.broadcast %cst_3 : f32 to vector<8x128xf32>
    %9 = arith.addf %8, %7 : vector<8x128xf32>
    %10 = arith.divf %8, %9 : vector<8x128xf32>
    %11 = arith.mulf %10, %10 : vector<8x128xf32>
    %cst_4 = arith.constant 7.500000e-01 : f32
    %12 = vector.broadcast %cst_4 : f32 to vector<8x128xf32>
    %13 = arith.mulf %12, %11 : vector<8x128xf32>
    %cst_5 = arith.constant 1.000000e+00 : f32
    %14 = vector.broadcast %cst_5 : f32 to vector<8x128xf32>
    %15 = arith.subf %14, %5 : vector<8x128xf32>
    %16 = arith.mulf %13, %15 : vector<8x128xf32>
    %17 = arith.addf %16, %1 : vector<8x128xf32>
    %cst_6 = arith.constant -1.000000e+01 : f32
    %cst_7 = arith.constant 1.000000e+01 : f32
    %18 = vector.broadcast %cst_6 : f32 to vector<8x128xf32>
    %19 = arith.maximumf %18, %0 : vector<8x128xf32>
    %20 = vector.broadcast %cst_7 : f32 to vector<8x128xf32>
    %21 = arith.minimumf %20, %19 : vector<8x128xf32>
    %cst_8 = arith.constant 0.000000e+00 : f32
    %22 = vector.broadcast %cst_8 : f32 to vector<8x128xf32>
    %23 = arith.maximumf %21, %22 : vector<8x128xf32>
    %24 = arith.mulf %21, %1 : vector<8x128xf32>
    %25 = arith.subf %23, %24 : vector<8x128xf32>
    %26 = math.absf %21 : vector<8x128xf32>
    %cst_9 = arith.constant 0.000000e+00 : f32
    %27 = vector.broadcast %cst_9 : f32 to vector<8x128xf32>
    %28 = arith.subf %27, %26 : vector<8x128xf32>
    %29 = math.exp %28 : vector<8x128xf32>
    %30 = math.log1p %29 : vector<8x128xf32>
    %31 = arith.addf %25, %30 : vector<8x128xf32>
    %32 = arith.mulf %31, %17 : vector<8x128xf32>
    %33 = tpu.weird %32 : vector<8x128xf32> -> vector<8x128xi1>
    %cst_10 = arith.constant dense<true> : vector<8x128xi1>
    %34 = arith.xori %33, %cst_10 : vector<8x128xi1>
    %cst_11 = arith.constant 0.000000e+00 : f32
    %35 = vector.broadcast %cst_11 : f32 to vector<8x128xf32>
    %36 = arith.select %34, %32, %35 : vector<8x128xi1>, vector<8x128xf32>
    %37 = vector.shape_cast %36 : vector<8x128xf32> to vector<1x8x128xf32>
    %cst_12 = arith.constant dense<0.000000e+00> : vector<1xf32>
    %38 = vector.multi_reduction <add>, %37, %cst_12 [1, 2] : vector<1x8x128xf32> to vector<1xf32>
    %39 = vector.shape_cast %38 : vector<1xf32> to vector<1x1x1xf32>
    %40 = vector.extract %39[0, 0, 0] : f32 from vector<1x1x1xf32>
    %41 = vector.broadcast %40 : f32 to vector<1x8x128xf32>
    %c0_13 = arith.constant 0 : index
    %c0_14 = arith.constant 0 : index
    %c0_15 = arith.constant 0 : index
    %42 = vector.load %arg3[%c0_13, %c0_14, %c0_15] : memref<1x8x128xf32, #tpu.memory_space<vmem>>, vector<1x8x128xf32>
    tpu.vector_store %arg3[%c0_13, %c0_14, %c0_15], %41 {strides = array<i32>} : memref<1x8x128xf32, #tpu.memory_space<vmem>>, vector<1x8x128xf32>,
    return
  }
  func.func @transform_0(%arg0: i32) -> (i32, i32) {
    %c0_i32 = arith.constant 0 : i32
    %c0_i32_0 = arith.constant 0 : i32
    return %arg0, %c0_i32 : i32, i32
  }
  func.func @transform_1(%arg0: i32) -> (i32, i32) {
    %c0_i32 = arith.constant 0 : i32
    %c0_i32_0 = arith.constant 0 : i32
    return %arg0, %c0_i32 : i32, i32
  }
  func.func @transform_2(%arg0: i32) -> (i32, i32, i32) {
    %c0_i32 = arith.constant 0 : i32
    %c0_i32_0 = arith.constant 0 : i32
    %c0_i32_1 = arith.constant 0 : i32
    return %arg0, %c0_i32, %c0_i32_0 : i32, i32, i32
  }
}

</mosaic_0001>

<llo_original>
// kernel: tpu_custom_call.1
$region0: #{tpu_custom_call.1}
  #allocation0 [shape = 'u32[]', space=smem, size = 0x4, offset = 0x4, fixed_abs, tag = 'smem constant byte address 0x4 - core index']
  #allocation1 [shape = 'u32[72,128]{1,0:T(1,128)}', space=vmem, size = 0x9000, scoped, tag = 'internal scratch']
  %s0 = inlined_call_operand.hbm [shape: f32[16,128], index: 0, kind: input, shape index: {}]
  %s1 = inlined_call_operand.hbm [shape: f32[16,128], index: 1, kind: input, shape index: {}]
  %s2 = inlined_call_operand.hbm [shape: f32[2,8,128], index: 2, kind: output, shape index: {}]
  %s3 = sld [smem:[#allocation0]]
  $region49: #{tpu_custom_call.1} parent=0
    _
  %s5 = ssub.s32 1, %s3
  %s6 = scalar_select 0, %s5, %s3
  $region1: #{tpu_custom_call.1} parent=0
    #allocation2 [shape = 'u8[8192]{0}', space=vmem, size = 0x2000, scoped, tag = 'input window, operand 0']
    #allocation3 [shape = 's32[2]{0}', space=sflag, size = 0x8, scoped, tag = 'scoped memory for tpu_custom_call.1']
    #allocation4 [shape = 's32[2]{0}', space=sflag, size = 0x8, scoped, tag = 'scoped memory for tpu_custom_call.1']
    #allocation5 [shape = 'u8[8192]{0}', space=vmem, size = 0x2000, scoped, tag = 'input window, operand 1']
    #allocation6 [shape = 's32[2]{0}', space=sflag, size = 0x8, scoped, tag = 'scoped memory for tpu_custom_call.1']
    #allocation7 [shape = 'u8[8192]{0}', space=vmem, size = 0x2000, scoped, tag = 'output window, operand 0']
    %7 = vsyncpa [#allocation3], 0
    %s8 = scalar_lea.sflag [#allocation3], 1
    %9 = vsyncpa %s8, 0
    %10 = vsyncpa [#allocation6], 0
    %s11 = scalar_lea.sflag [#allocation6], 1
    %12 = vsyncpa %s11, 0
    %13 = vsyncpa [#allocation4], 0
    %s14 = scalar_lea.sflag [#allocation4], 1
    %15 = vsyncpa %s14, 0
    loop: start=0, step=1, limit=4
    $region2: #{tpu_custom_call.1} parent=1 // loop_pre_header
      _
    $region3: #{tpu_custom_call.1} parent=1 // loop_header
      %s17 = sphi 0, %s21
      %p18 = scmp.ge.s32.totalorder %s17, 4
      %s27 = sphi 0, %s29
      %s30 = sphi 0, %s27
      %s31 = sphi 0, %s30
      %s47 = sphi 0, %s31
      %s53 = sphi 0, %s55
      %s56 = sphi 0, %s53
      %s57 = sphi 0, %s56
      %s73 = sphi 0, %s57
      %s79 = sphi 0, %s81
      %s82 = sphi 0, %s79
      %s83 = sphi 0, %s82
      %s99 = sphi 0, %s83
    $region4: #{tpu_custom_call.1} parent=1 // loop_header_branch
      %20 = sbr.rel (%p18) target = $region8
    $region5: #{tpu_custom_call.1} parent=1 // loop_body
      %s22 = ssub.s32 %s17, 1
      %s23 = ssub.s32 %s17, 2
      %s24 = sadd.s32 %s17, 1
      %s25 = ssub.s32 %s17, %s24
      %p26 = scmp.eq.s32.totalorder %s25, 0
      %s28 = sadd.s32 %s27, 1
      %s29 = scalar_select %p26, %s27, %s28
      %p32 = pneg %p26
      %p33 = scmp.eq.s32.totalorder %s17, 1
      %p34 = por %p32, %p33
      %p35 = scmp.ne.s32.totalorder %s27, %s30
      %p36 = scmp.eq.s32.totalorder %s17, 0
      %p37 = por %p35, %p36
      %p38 = scmp.ne.s32.totalorder %s27, %s30
      %p39 = scmp.eq.s32.totalorder %s22, 1
      %p40 = por %p38, %p39
      %p41 = scmp.ne.s32.totalorder %s30, %s31
      %p42 = scmp.eq.s32.totalorder %s22, 0
      %p43 = por %p41, %p42
      %p44 = scmp.ne.s32.totalorder %s30, %s31
      %p45 = scmp.eq.s32.totalorder %s23, 1
      %p46 = por %p44, %p45
      %p48 = scmp.ne.s32.totalorder %s31, %s47
      %p49 = scmp.eq.s32.totalorder %s23, 0
      %p50 = por %p48, %p49
      %s51 = ssub.s32 %s17, %s24
      %p52 = scmp.eq.s32.totalorder %s51, 0
      %s54 = sadd.s32 %s53, 1
      %s55 = scalar_select %p52, %s53, %s54
      %p58 = pneg %p52
      %p59 = scmp.eq.s32.totalorder %s17, 1
      %p60 = por %p58, %p59
      %p61 = scmp.ne.s32.totalorder %s53, %s56
      %p62 = scmp.eq.s32.totalorder %s17, 0
      %p63 = por %p61, %p62
      %p64 = scmp.ne.s32.totalorder %s53, %s56
      %p65 = scmp.eq.s32.totalorder %s22, 1
      %p66 = por %p64, %p65
      %p67 = scmp.ne.s32.totalorder %s56, %s57
      %p68 = scmp.eq.s32.totalorder %s22, 0
      %p69 = por %p67, %p68
      %p70 = scmp.ne.s32.totalorder %s56, %s57
      %p71 = scmp.eq.s32.totalorder %s23, 1
      %p72 = por %p70, %p71
      %p74 = scmp.ne.s32.totalorder %s57, %s73
      %p75 = scmp.eq.s32.totalorder %s23, 0
      %p76 = por %p74, %p75
      %s77 = ssub.s32 %s17, %s24
      %p78 = scmp.eq.s32.totalorder %s77, 0
      %s80 = sadd.s32 %s79, 1
      %s81 = scalar_select %p78, %s79, %s80
      %p84 = pneg %p78
      %p85 = scmp.eq.s32.totalorder %s17, 1
      %p86 = por %p84, %p85
      %p87 = scmp.ne.s32.totalorder %s79, %s82
      %p88 = scmp.eq.s32.totalorder %s17, 0
      %p89 = por %p87, %p88
      %p90 = scmp.ne.s32.totalorder %s79, %s82
      %p91 = scmp.eq.s32.totalorder %s22, 1
      %p92 = por %p90, %p91
      %p93 = scmp.ne.s32.totalorder %s82, %s83
      %p94 = scmp.eq.s32.totalorder %s22, 0
      %p95 = por %p93, %p94
      %p96 = scmp.ne.s32.totalorder %s82, %s83
      %p97 = scmp.eq.s32.totalorder %s23, 1
      %p98 = por %p96, %p97
      %p100 = scmp.ne.s32.totalorder %s83, %s99
      %p101 = scmp.eq.s32.totalorder %s23, 0
      %p102 = por %p100, %p101
      %p103 = scmp.le.s32.totalorder 1, %s17
      %p104 = scmp.lt.s32.totalorder %s17, 3
      %p105 = pnand %p103, %p104
      %p106 = pneg %p105
      // Predicated region
      $region9: #{tpu_custom_call.1} parent=5 // pred_check
        _
      $region10: #{tpu_custom_call.1} parent=5 // pred_check_branch
        %108 = sbr.rel (%p105) target = $region12
      $region11: #{tpu_custom_call.1} parent=5 // pred_region
        %s109 = ssub.s32 %s17, 1
      $region12: #{tpu_custom_call.1} parent=5 // pred_fallthru
        _
      %p110 = scmp.lt.s32.totalorder %s17, 2
      // Predicated region
      $region13: #{tpu_custom_call.1} parent=5 // pred_check
        %p111 = pneg %p110
      $region14: #{tpu_custom_call.1} parent=5 // pred_check_branch
        %113 = sbr.rel (%p111) target = $region16
      $region15: #{tpu_custom_call.1} parent=5 // pred_region
        // Predicated region
        $region17: #{tpu_custom_call.1} parent=15 // pred_check
          %p114 = pneg %p37
        $region18: #{tpu_custom_call.1} parent=15 // pred_check_branch
          %116 = sbr.rel (%p114) target = $region20
        $region19: #{tpu_custom_call.1} parent=15 // pred_region
          %s117 = sand.u32 %s27, 1
          %s118 = scalar_lea.sflag [#allocation3], %s117
          %s119 = sand.u32 %s27, 1
          %s120 = smul.addr %s119, 8
          %s121 = scalar_lea.vmem [#allocation2], %s120
          %123 = vsyncadd %s118, 0
          %s124 = smul.addr %s17, 8
          %s125 = scalar_lea.hbm %s0, %s124
          %s127 = sshll.u32 %s125, 4
          %s128 = int_to_ptr.hbm [resolvable:$true] %s127
          %s129 = sshll.u32 %s121, 4
          %s130 = int_to_ptr.vmem [resolvable:$true] %s129
          %132 = dma.hbm_to_vmem [thread:$0]  %s128, 128, %s130, %s118
        $region20: #{tpu_custom_call.1} parent=15 // pred_fallthru
          _
        // Predicated region
        $region21: #{tpu_custom_call.1} parent=15 // pred_check
          %p133 = pneg %p63
        $region22: #{tpu_custom_call.1} parent=15 // pred_check_branch
          %135 = sbr.rel (%p133) target = $region24
        $region23: #{tpu_custom_call.1} parent=15 // pred_region
          %s136 = sand.u32 %s53, 1
          %s137 = scalar_lea.sflag [#allocation6], %s136
          %s138 = sand.u32 %s53, 1
          %s139 = smul.addr %s138, 8
          %s140 = scalar_lea.vmem [#allocation5], %s139
          %142 = vsyncadd %s137, 0
          %s143 = smul.addr %s17, 8
          %s144 = scalar_lea.hbm %s1, %s143
          %s146 = sshll.u32 %s144, 4
          %s147 = int_to_ptr.hbm [resolvable:$true] %s146
          %s148 = sshll.u32 %s140, 4
          %s149 = int_to_ptr.vmem [resolvable:$true] %s148
          %151 = dma.hbm_to_vmem [thread:$0]  %s147, 128, %s149, %s137
        $region24: #{tpu_custom_call.1} parent=15 // pred_fallthru
          _
      $region16: #{tpu_custom_call.1} parent=5 // pred_fallthru
        _
      %p152 = scmp.le.s32.totalorder 1, %s17
      %p153 = scmp.lt.s32.totalorder %s17, 3
      %p154 = pnand %p152, %p153
      %p155 = pneg %p154
      // Predicated region
      $region25: #{tpu_custom_call.1} parent=5 // pred_check
        _
      $region26: #{tpu_custom_call.1} parent=5 // pred_check_branch
        %157 = sbr.rel (%p154) target = $region28
      $region27: #{tpu_custom_call.1} parent=5 // pred_region
        %s158 = ssub.s32 %s17, 1
        %s159 = sand.u32 %s30, 1
        %s160 = scalar_lea.sflag [#allocation3], %s159
        %s161 = sand.u32 %s30, 1
        %s162 = smul.addr %s161, 8
        %s163 = scalar_lea.vmem [#allocation2], %s162
        // Predicated region
        $region29: #{tpu_custom_call.1} parent=27 // pred_check
          %p164 = pneg %p43
        $region30: #{tpu_custom_call.1} parent=27 // pred_check_branch
          %166 = sbr.rel (%p164) target = $region32
        $region31: #{tpu_custom_call.1} parent=27 // pred_region
          %168 = dma.done %s160, 128
        $region32: #{tpu_custom_call.1} parent=27 // pred_fallthru
          _
        %s169 = sand.u32 %s56, 1
        %s170 = scalar_lea.sflag [#allocation6], %s169
        %s171 = sand.u32 %s56, 1
        %s172 = smul.addr %s171, 8
        %s173 = scalar_lea.vmem [#allocation5], %s172
        // Predicated region
        $region33: #{tpu_custom_call.1} parent=27 // pred_check
          %p174 = pneg %p69
        $region34: #{tpu_custom_call.1} parent=27 // pred_check_branch
          %176 = sbr.rel (%p174) target = $region36
        $region35: #{tpu_custom_call.1} parent=27 // pred_region
          %178 = dma.done %s170, 128
        $region36: #{tpu_custom_call.1} parent=27 // pred_fallthru
          _
        %s179 = sand.u32 %s30, 1
        %s180 = scalar_lea.sflag [#allocation3], %s179
        %s181 = sand.u32 %s30, 1
        %s182 = smul.addr %s181, 8
        %s183 = scalar_lea.vmem [#allocation2], %s182
        %p184 = pneg %p43
        %p185 = pneg %p40
        %s186 = sand.u32 %s56, 1
        %s187 = scalar_lea.sflag [#allocation6], %s186
        %s188 = sand.u32 %s56, 1
        %s189 = smul.addr %s188, 8
        %s190 = scalar_lea.vmem [#allocation5], %s189
        %p191 = pneg %p69
        %p192 = pneg %p66
        %p193 = pneg %p95
        %p194 = pneg %p92
        %s195 = sand.u32 %s82, 1
        %s196 = scalar_lea.sflag [#allocation4], %s195
        %s197 = sand.u32 %s82, 1
        %s198 = smul.addr %s197, 8
        %s199 = scalar_lea.vmem [#allocation7], %s198
        %v200 = vld [vmem:[%s163] sm:$0xff]
        %v201 = vld [vmem:[%s173] sm:$0xff]
        %vm202 = vcmp.gt.f32.partialorder %v201, 0.0001
        %v203 = vsel %vm202, 1, 0
        %v204 = vcvt.s32.f32 %v203
        %v205 = vxor.u32 %v200, 2147483648
        %v206 = vmul.f32 %v205, 1.442695
        %v207 = vpow.pop %v206
        %v208 = vadd.f32 %v207, 1.0
        %v209 = vrcp.pop %v208
        %v210 = vmul.f32 %v208, %v209
        %v211 = vsub.f32 1.0, %v210
        %v212 = vmul.f32 %v209, %v211
        %v213 = vadd.f32 %v209, %v212
        %vm214 = vweird.f32 %v208
        %vm215 = vweird.f32 %v209
        %vm216 = vmor %vm214, %vm215
        %v217 = vsel %vm216, %v209, %v213
        %v218 = vand.u32 2147483647, %v208
        %vm219 = vcmp.eq.f32.partialorder %v218, 8.507059e+37
        %v220 = vand.u32 %v208, 2147483648
        %v221 = vor.u32 1.1754944e-38, %v220
        %v222 = vsel %vm219, %v221, %v217
        %v223 = vmul.f32 1.0, %v222
        %v224 = vmul.f32 %v223, %v223
        %v225 = vmul.f32 %v224, 0.75
        %v226 = vsub.f32 1.0, %v204
        %v227 = vmul.f32 %v225, %v226
        %v228 = vadd.f32 %v227, %v201
        %v229 = vmax.f32 %v200, -10.0
        %v230 = vmin.f32 %v229, 10.0
        %v231 = vmax.f32 %v230, 0.0
        %v232 = vmul.f32 %v230, %v201
        %v233 = vsub.f32 %v231, %v232
        %v234 = vand.u32 2147483647, %v230
        %v235 = vsub.f32 0.0, %v234
        %v236 = vmul.f32 %v235, 1.442695
        %v237 = vpow.pop %v236
        %v238 = vadd.f32 %v237, 1.0
        %v239 = vlog2.pop %v238
        %v240 = vmul.f32 %v239, 0.6931472
        %v241 = vmul.f32 -0.5, %v237
        %v242 = vadd.f32 %v241, 1.0
        %v243 = vmul.f32 %v242, %v237
        %v244 = vand.u32 2147483647, %v237
        %vm245 = vcmp.lt.f32.partialorder %v244, 0.0004427343
        %v246 = vsel %vm245, %v243, %v240
        %v247 = vadd.f32 %v233, %v246
        %v248 = vmul.f32 %v247, %v228
        %vm249 = vweird.f32 %v248
        %vm250 = vmxor %vm249, 1
        %v251 = vsel %vm250, %v248, 0.0
        %252 = vadd.xlane.f32.xlu0 %v251
        %v253 = vpop.xlane.xlu0 %252
        %v254 = vrot.slane %v253, 4
        %v255 = vadd.f32 %v253, %v254
        %v256 = vrot.slane %v255, 2
        %v257 = vadd.f32 %v255, %v256
        %v258 = vrot.slane %v257, 1
        %v259 = vadd.f32 %v257, %v258
        %s260 = vtos %v259
        %v261 = vstv %s260
        %262 = vst [vmem:[%s199] sm:$0xff] %v261
        %s263 = sand.u32 %s82, 1
        %s264 = scalar_lea.sflag [#allocation4], %s263
        %s265 = sand.u32 %s82, 1
        %s266 = smul.addr %s265, 8
        %s267 = scalar_lea.vmem [#allocation7], %s266
        // Predicated region
        $region37: #{tpu_custom_call.1} parent=27 // pred_check
          %p268 = pneg %p92
        $region38: #{tpu_custom_call.1} parent=27 // pred_check_branch
          %270 = sbr.rel (%p268) target = $region40
        $region39: #{tpu_custom_call.1} parent=27 // pred_region
          %272 = vsyncadd %s264, 0
          %s273 = smul.addr %s22, 8
          %s274 = scalar_lea.hbm %s2, %s273
          %s276 = sshll.u32 %s267, 4
          %s277 = int_to_ptr.vmem [resolvable:$true] %s276
          %s278 = sshll.u32 %s274, 4
          %s279 = int_to_ptr.hbm [resolvable:$true] %s278
          %281 = dma.vmem_to_hbm [thread:$0]  %s277, 128, %s279, %s264
        $region40: #{tpu_custom_call.1} parent=27 // pred_fallthru
          _
      $region28: #{tpu_custom_call.1} parent=5 // pred_fallthru
        _
      %p282 = scmp.le.s32.totalorder 2, %s17
      // Predicated region
      $region41: #{tpu_custom_call.1} parent=5 // pred_check
        %p283 = pneg %p282
      $region42: #{tpu_custom_call.1} parent=5 // pred_check_branch
        %285 = sbr.rel (%p283) target = $region44
      $region43: #{tpu_custom_call.1} parent=5 // pred_region
        %s286 = ssub.s32 %s17, 2
        // Predicated region
        $region45: #{tpu_custom_call.1} parent=43 // pred_check
          %p287 = pneg %p98
        $region46: #{tpu_custom_call.1} parent=43 // pred_check_branch
          %289 = sbr.rel (%p287) target = $region48
        $region47: #{tpu_custom_call.1} parent=43 // pred_region
          %s290 = sand.u32 %s83, 1
          %s291 = scalar_lea.sflag [#allocation4], %s290
          %s292 = sand.u32 %s83, 1
          %s293 = smul.addr %s292, 8
          %s294 = scalar_lea.vmem [#allocation7], %s293
          %296 = dma.done %s291, 128
        $region48: #{tpu_custom_call.1} parent=43 // pred_fallthru
          _
      $region44: #{tpu_custom_call.1} parent=5 // pred_fallthru
        _
    $region6: #{tpu_custom_call.1} parent=1 // loop_footer
      %s21 = sadd.s32 1, %s17
    $region7: #{tpu_custom_call.1} parent=1 // loop_footer_branch
      %16 = sbr.rel target = $region3
    $region8: #{tpu_custom_call.1} parent=1 // loop_exit
      _
    %297 = vsyncpa [#allocation3], 1
    %s298 = scalar_lea.sflag [#allocation3], 1
    %299 = vsyncpa %s298, 1
    %300 = vsyncpa [#allocation6], 1
    %s301 = scalar_lea.sflag [#allocation6], 1
    %302 = vsyncpa %s301, 1
    %303 = vsyncpa [#allocation4], 1
    %s304 = scalar_lea.sflag [#allocation4], 1
    %305 = vsyncpa %s304, 1

</llo_original>
